<compile_context>
chip_gen: v6e
topology: v6e:2x2x1
jax: 0.10.0
libtpu: 0.0.40
codegen_flags: <defaults>
</compile_context>

<pallas_src>
import jax
import jax.numpy as jnp
from jax.experimental import pallas as pl
from jax.experimental.pallas import tpu as pltpu


def _se_kernel(x_ref, w1_ref, w2_ref, o_ref):
    # x_ref : (1, HW, c)   one batch, channels-last (c on the lane axis)
    # w1_ref: (c, c//r)    first linear (no bias), stored as (in, out)
    # w2_ref: (c//r, c)    second linear (no bias), stored as (in, out)
    # o_ref : (1, HW, c)   output block, same dtype as input
    hw = x_ref.shape[1]
    inv_hw = 1.0 / hw

    # squeeze: global average pool over spatial (sublane) axis, f32 accumulate.
    y = jnp.sum(x_ref[0], axis=0, keepdims=True, dtype=jnp.float32) * inv_hw  # (1, c)

    # excitation: Linear -> ReLU -> Linear -> Sigmoid (tiny; runs once per batch).
    h = jnp.dot(y, w1_ref[...], preferred_element_type=jnp.float32)
    h = jnp.maximum(h, 0.0)
    s = jax.nn.sigmoid(
        jnp.dot(h, w2_ref[...], preferred_element_type=jnp.float32)
    )  # (1, c) f32

    # scale: broadcast s over spatial; fused f32 multiply, cast on store.
    o_ref[0] = (x_ref[0].astype(jnp.float32) * s).astype(o_ref.dtype)


def se_block(x_nchw, w1, w2):
    """SE block forward.  x_nchw: (bs, c, H, W); w1: (c, c//r); w2: (c//r, c)."""
    bs, c, H, W = x_nchw.shape
    hw = H * W
    cr = w1.shape[1]

    # channels-last for the kernel: (bs, HW, c)
    x_hwc = jnp.transpose(x_nchw, (0, 2, 3, 1)).reshape(bs, hw, c)

    itemsize = jnp.dtype(x_nchw.dtype).itemsize
    block_bytes = hw * c * itemsize
    # 2 pipelined buffers each for the input and output block + weights + slack.
    vmem_bytes = 4 * block_bytes + (w1.size + w2.size) * 4 + (4 << 20)
    vmem_limit = int(min(max(vmem_bytes, 32 << 20), 64 << 20))

    cost = pl.CostEstimate(
        flops=int(4 * bs * c * cr + 2 * bs * hw * c),
        transcendentals=int(bs * c),
        bytes_accessed=int(
            2 * bs * block_bytes
            + (w1.size + w2.size) * jnp.dtype(w1.dtype).itemsize
        ),
    )

    out_hwc = pl.pallas_call(
        _se_kernel,
        out_shape=jax.ShapeDtypeStruct((bs, hw, c), x_nchw.dtype),
        grid_spec=pltpu.PrefetchScalarGridSpec(
            num_scalar_prefetch=0,
            grid=(bs,),
            in_specs=[
                pl.BlockSpec((1, hw, c), lambda b: (b, 0, 0)),   # per-batch slab
                pl.BlockSpec((c, cr), lambda b: (0, 0)),          # resident weights
                pl.BlockSpec((cr, c), lambda b: (0, 0)),          # resident weights
            ],
            out_specs=pl.BlockSpec((1, hw, c), lambda b: (b, 0, 0)),
        ),
        compiler_params=pltpu.CompilerParams(
            dimension_semantics=("parallel",),   # v7x: split batches across 2 TCs
            vmem_limit_bytes=vmem_limit,
        ),
        cost_estimate=cost,
    )(x_hwc, w1, w2)

    return jnp.transpose(out_hwc.reshape(bs, H, W, c), (0, 3, 1, 2))


def se_block_ref(x_nchw, w1, w2):
    """Pure-JAX reference matching the PyTorch module semantics."""
    y = jnp.mean(x_nchw.astype(jnp.float32), axis=(2, 3))          # (bs, c)
    h = jnp.maximum(y @ w1, 0.0)                                   # (bs, c//r)
    s = jax.nn.sigmoid(h @ w2)                                     # (bs, c)
    return (x_nchw.astype(jnp.float32) * s[:, :, None, None]).astype(x_nchw.dtype)


if __name__ == "__main__":
    # Small shapes consistent with the module: c must be >= r so c // r >= 1.
    bs, c, H, W = 2, 32, 8, 8
    r = 16
    cr = c // r  # 2

    key = jax.random.PRNGKey(0)
    kx, k1, k2 = jax.random.split(key, 3)

    x = jax.random.normal(kx, (bs, c, H, W), dtype=jnp.float32)
    # Linear(c, c//r, bias=False) / Linear(c//r, c, bias=False) weights stored
    # as (in, out) so the kernel does plain y @ W.
    w1 = jax.random.normal(k1, (c, cr), dtype=jnp.float32) * 0.1
    w2 = jax.random.normal(k2, (cr, c), dtype=jnp.float32) * 0.1

    out = se_block(x, w1, w2)
    jax.block_until_ready(out)

    ref = se_block_ref(x, w1, w2)
    assert out.shape == x.shape
    assert jnp.allclose(out, ref, atol=1e-5, rtol=1e-5), "mismatch vs reference"

    print("KERNEL_OK")
</pallas_src>

<mosaic_0001>
module attributes {stable_mosaic.version = 11 : i64} {
  func.func @_se_kernel(%arg0: i32, %arg1: memref<1x64x32xf32, #tpu.memory_space<vmem>>, %arg2: memref<32x2xf32, #tpu.memory_space<vmem>>, %arg3: memref<2x32xf32, #tpu.memory_space<vmem>>, %arg4: memref<1x64x32xf32, #tpu.memory_space<vmem>>) attributes {dimension_semantics = [#tpu.dimension_semantics<parallel>], iteration_bounds = array<i64: 2>, scalar_prefetch = 0 : i64, scratch_operands = 0 : i64, tpu.core_type = #tpu.core_type<tc>, window_params = [{transform_indices = @transform_0, window_bounds = array<i64: 1, 64, 32>}, {pipeline_mode = #tpu.pipeline_mode<synchronous>, transform_indices = @transform_1, window_bounds = array<i64: 32, 2>}, {pipeline_mode = #tpu.pipeline_mode<synchronous>, transform_indices = @transform_2, window_bounds = array<i64: 2, 32>}, {transform_indices = @transform_3, window_bounds = array<i64: 1, 64, 32>}]} {
    %c0 = arith.constant 0 : index
    %c0_0 = arith.constant 0 : index
    %c0_1 = arith.constant 0 : index
    %0 = vector.load %arg1[%c0, %c0_0, %c0_1] : memref<1x64x32xf32, #tpu.memory_space<vmem>>, vector<1x64x32xf32>
    %1 = vector.shape_cast %0 : vector<1x64x32xf32> to vector<64x32xf32>
    %cst = arith.constant dense<0.000000e+00> : vector<32xf32>
    %2 = vector.multi_reduction <add>, %1, %cst [0] : vector<64x32xf32> to vector<32xf32>
    %3 = vector.shape_cast %2 : vector<32xf32> to vector<1x32xf32>
    %cst_2 = arith.constant 1.562500e-02 : f32
    %4 = vector.broadcast %cst_2 : f32 to vector<1x32xf32>
    %5 = arith.mulf %3, %4 : vector<1x32xf32>
    %c0_3 = arith.constant 0 : index
    %c0_4 = arith.constant 0 : index
    %6 = vector.load %arg2[%c0_3, %c0_4] : memref<32x2xf32, #tpu.memory_space<vmem>>, vector<32x2xf32>
    %cst_5 = arith.constant dense<0.000000e+00> : vector<1x2xf32>
    %7 = tpu.matmul %5, %6, %cst_5 {dimension_numbers = #tpu.dot_dimension_numbers<[1], [0], [0], [1], [0, 0, 1, 1], [], []>} : vector<1x32xf32>, vector<32x2xf32>, vector<1x2xf32> -> vector<1x2xf32>
    %cst_6 = arith.constant 0.000000e+00 : f32
    %8 = vector.broadcast %cst_6 : f32 to vector<1x2xf32>
    %9 = arith.maximumf %7, %8 : vector<1x2xf32>
    %c0_7 = arith.constant 0 : index
    %c0_8 = arith.constant 0 : index
    %10 = vector.load %arg3[%c0_7, %c0_8] : memref<2x32xf32, #tpu.memory_space<vmem>>, vector<2x32xf32>
    %cst_9 = arith.constant dense<0.000000e+00> : vector<1x32xf32>
    %11 = tpu.matmul %9, %10, %cst_9 {dimension_numbers = #tpu.dot_dimension_numbers<[1], [0], [0], [1], [0, 0, 1, 1], [], []>} : vector<1x2xf32>, vector<2x32xf32>, vector<1x32xf32> -> vector<1x32xf32>
    %12 = arith.negf %11 : vector<1x32xf32>
    %13 = math.exp %12 : vector<1x32xf32>
    %cst_10 = arith.constant 1.000000e+00 : f32
    %14 = vector.broadcast %cst_10 : f32 to vector<1x32xf32>
    %15 = arith.addf %14, %13 : vector<1x32xf32>
    %16 = arith.divf %14, %15 : vector<1x32xf32>
    %c0_11 = arith.constant 0 : index
    %c0_12 = arith.constant 0 : index
    %c0_13 = arith.constant 0 : index
    %17 = vector.load %arg1[%c0_11, %c0_12, %c0_13] : memref<1x64x32xf32, #tpu.memory_space<vmem>>, vector<1x64x32xf32>
    %18 = vector.shape_cast %17 : vector<1x64x32xf32> to vector<64x32xf32>
    %19 = vector.broadcast %16 : vector<1x32xf32> to vector<64x32xf32>
    %20 = arith.mulf %18, %19 : vector<64x32xf32>
    %c0_14 = arith.constant 0 : index
    %c0_15 = arith.constant 0 : index
    %c0_16 = arith.constant 0 : index
    %21 = vector.load %arg4[%c0_14, %c0_15, %c0_16] : memref<1x64x32xf32, #tpu.memory_space<vmem>>, vector<1x64x32xf32>
    %22 = vector.shape_cast %21 : vector<1x64x32xf32> to vector<64x32xf32>
    %23 = vector.shape_cast %20 : vector<64x32xf32> to vector<1x64x32xf32>
    tpu.vector_store %arg4[%c0_14, %c0_15, %c0_16], %23 {strides = array<i32>} : memref<1x64x32xf32, #tpu.memory_space<vmem>>, vector<1x64x32xf32>,
    return
  }
  func.func @transform_0(%arg0: i32) -> (i32, i32, i32) {
    %c0_i32 = arith.constant 0 : i32
    %c0_i32_0 = arith.constant 0 : i32
    %c0_i32_1 = arith.constant 0 : i32
    return %arg0, %c0_i32, %c0_i32_0 : i32, i32, i32
  }
  func.func @transform_1(%arg0: i32) -> (i32, i32) {
    %c0_i32 = arith.constant 0 : i32
    %c0_i32_0 = arith.constant 0 : i32
    %c0_i32_1 = arith.constant 0 : i32
    return %c0_i32, %c0_i32_0 : i32, i32
  }
  func.func @transform_2(%arg0: i32) -> (i32, i32) {
    %c0_i32 = arith.constant 0 : i32
    %c0_i32_0 = arith.constant 0 : i32
    %c0_i32_1 = arith.constant 0 : i32
    return %c0_i32, %c0_i32_0 : i32, i32
  }
  func.func @transform_3(%arg0: i32) -> (i32, i32, i32) {
    %c0_i32 = arith.constant 0 : i32
    %c0_i32_0 = arith.constant 0 : i32
    %c0_i32_1 = arith.constant 0 : i32
    return %arg0, %c0_i32, %c0_i32_0 : i32, i32, i32
  }
}

</mosaic_0001>

<llo_original>
// kernel: tpu_custom_call.1
$region0: #{tpu_custom_call.1}
  #allocation0 [shape = 'u32[]', space=smem, size = 0x4, offset = 0x4, fixed_abs, tag = 'smem constant byte address 0x4 - core index']
  #allocation1 [shape = 'u32[144,128]{1,0:T(1,128)}', space=vmem, size = 0x12000, scoped, tag = 'internal scratch']
  %s0 = inlined_call_operand.vmem [shape: f32[2,64,32], index: 0, kind: input, shape index: {}]
  %s1 = inlined_call_operand.vmem [shape: f32[32,2], index: 1, kind: input, shape index: {}]
  %s2 = inlined_call_operand.vmem [shape: f32[2,32], index: 2, kind: input, shape index: {}]
  %s3 = inlined_call_operand.vmem [shape: f32[2,64,32], index: 3, kind: output, shape index: {}]
  %s4 = sld [smem:[#allocation0]]
  $region45: #{tpu_custom_call.1} parent=0
    _
  %s6 = ssub.s32 1, %s4
  %s7 = scalar_select 0, %s6, %s4
  loop: start=0, step=1, limit=4
  $region2: #{tpu_custom_call.1} parent=0 // loop_pre_header
    _
  $region3: #{tpu_custom_call.1} parent=0 // loop_header
    %s9 = sphi 0, %s13
    %p10 = scmp.ge.s32.totalorder %s9, 4
    %s19 = sphi 0, %s21
    %s22 = sphi 0, %s19
    %s23 = sphi 0, %s22
    %s39 = sphi 0, %s23
    %s43 = sphi 0, %s43
    %s45 = sphi 0, %s43
    %s46 = sphi 0, %s45
    %s60 = sphi 0, %s46
    %s64 = sphi 0, %s64
    %s66 = sphi 0, %s64
    %s67 = sphi 0, %s66
    %s81 = sphi 0, %s67
    %s87 = sphi 0, %s89
    %s90 = sphi 0, %s87
    %s91 = sphi 0, %s90
    %s107 = sphi 0, %s91
  $region4: #{tpu_custom_call.1} parent=0 // loop_header_branch
    %12 = sbr.rel (%p10) target = $region8
  $region5: #{tpu_custom_call.1} parent=0 // loop_body
    %s14 = ssub.s32 %s9, 1
    %s15 = ssub.s32 %s9, 2
    %s16 = sadd.s32 %s9, 1
    %s17 = ssub.s32 %s9, %s16
    %p18 = scmp.eq.s32.totalorder %s17, 0
    %s20 = sadd.s32 %s19, 1
    %s21 = scalar_select %p18, %s19, %s20
    %p24 = pneg %p18
    %p25 = scmp.eq.s32.totalorder %s9, 1
    %p26 = por %p24, %p25
    %p27 = scmp.ne.s32.totalorder %s19, %s22
    %p28 = scmp.eq.s32.totalorder %s9, 0
    %p29 = por %p27, %p28
    %p30 = scmp.ne.s32.totalorder %s19, %s22
    %p31 = scmp.eq.s32.totalorder %s14, 1
    %p32 = por %p30, %p31
    %p33 = scmp.ne.s32.totalorder %s22, %s23
    %p34 = scmp.eq.s32.totalorder %s14, 0
    %p35 = por %p33, %p34
    %p36 = scmp.ne.s32.totalorder %s22, %s23
    %p37 = scmp.eq.s32.totalorder %s15, 1
    %p38 = por %p36, %p37
    %p40 = scmp.ne.s32.totalorder %s23, %s39
    %p41 = scmp.eq.s32.totalorder %s15, 0
    %p42 = por %p40, %p41
    %s44 = sadd.s32 %s43, 1
    %p47 = scmp.eq.s32.totalorder %s9, 1
    %p48 = scmp.ne.s32.totalorder %s43, %s45
    %p49 = scmp.eq.s32.totalorder %s9, 0
    %p50 = por %p48, %p49
    %p51 = scmp.ne.s32.totalorder %s43, %s45
    %p52 = scmp.eq.s32.totalorder %s14, 1
    %p53 = por %p51, %p52
    %p54 = scmp.ne.s32.totalorder %s45, %s46
    %p55 = scmp.eq.s32.totalorder %s14, 0
    %p56 = por %p54, %p55
    %p57 = scmp.ne.s32.totalorder %s45, %s46
    %p58 = scmp.eq.s32.totalorder %s15, 1
    %p59 = por %p57, %p58
    %p61 = scmp.ne.s32.totalorder %s46, %s60
    %p62 = scmp.eq.s32.totalorder %s15, 0
    %p63 = por %p61, %p62
    %s65 = sadd.s32 %s64, 1
    %p68 = scmp.eq.s32.totalorder %s9, 1
    %p69 = scmp.ne.s32.totalorder %s64, %s66
    %p70 = scmp.eq.s32.totalorder %s9, 0
    %p71 = por %p69, %p70
    %p72 = scmp.ne.s32.totalorder %s64, %s66
    %p73 = scmp.eq.s32.totalorder %s14, 1
    %p74 = por %p72, %p73
    %p75 = scmp.ne.s32.totalorder %s66, %s67
    %p76 = scmp.eq.s32.totalorder %s14, 0
    %p77 = por %p75, %p76
    %p78 = scmp.ne.s32.totalorder %s66, %s67
    %p79 = scmp.eq.s32.totalorder %s15, 1
    %p80 = por %p78, %p79
    %p82 = scmp.ne.s32.totalorder %s67, %s81
    %p83 = scmp.eq.s32.totalorder %s15, 0
    %p84 = por %p82, %p83
    %s85 = ssub.s32 %s9, %s16
    %p86 = scmp.eq.s32.totalorder %s85, 0
    %s88 = sadd.s32 %s87, 1
    %s89 = scalar_select %p86, %s87, %s88
    %p92 = pneg %p86
    %p93 = scmp.eq.s32.totalorder %s9, 1
    %p94 = por %p92, %p93
    %p95 = scmp.ne.s32.totalorder %s87, %s90
    %p96 = scmp.eq.s32.totalorder %s9, 0
    %p97 = por %p95, %p96
    %p98 = scmp.ne.s32.totalorder %s87, %s90
    %p99 = scmp.eq.s32.totalorder %s14, 1
    %p100 = por %p98, %p99
    %p101 = scmp.ne.s32.totalorder %s90, %s91
    %p102 = scmp.eq.s32.totalorder %s14, 0
    %p103 = por %p101, %p102
    %p104 = scmp.ne.s32.totalorder %s90, %s91
    %p105 = scmp.eq.s32.totalorder %s15, 1
    %p106 = por %p104, %p105
    %p108 = scmp.ne.s32.totalorder %s91, %s107
    %p109 = scmp.eq.s32.totalorder %s15, 0
    %p110 = por %p108, %p109
    %p111 = scmp.le.s32.totalorder 1, %s9
    %p112 = scmp.lt.s32.totalorder %s9, 3
    %p113 = pnand %p111, %p112
    %p114 = pneg %p113
    // Predicated region
    $region9: #{tpu_custom_call.1} parent=5 // pred_check
      _
    $region10: #{tpu_custom_call.1} parent=5 // pred_check_branch
      %116 = sbr.rel (%p113) target = $region12
    $region11: #{tpu_custom_call.1} parent=5 // pred_region
      %s117 = ssub.s32 %s9, 1
      // Predicated region
      $region13: #{tpu_custom_call.1} parent=11 // pred_check
        %p118 = pneg %p56
      $region14: #{tpu_custom_call.1} parent=11 // pred_check_branch
        %120 = sbr.rel (%p118) target = $region16
      $region15: #{tpu_custom_call.1} parent=11 // pred_region
        _
      $region16: #{tpu_custom_call.1} parent=11 // pred_fallthru
        _
      // Predicated region
      $region17: #{tpu_custom_call.1} parent=11 // pred_check
        %p121 = pneg %p77
      $region18: #{tpu_custom_call.1} parent=11 // pred_check_branch
        %123 = sbr.rel (%p121) target = $region20
      $region19: #{tpu_custom_call.1} parent=11 // pred_region
        _
      $region20: #{tpu_custom_call.1} parent=11 // pred_fallthru
        _
    $region12: #{tpu_custom_call.1} parent=5 // pred_fallthru
      _
    %p124 = scmp.lt.s32.totalorder %s9, 2
    // Predicated region
    $region21: #{tpu_custom_call.1} parent=5 // pred_check
      %p125 = pneg %p124
    $region22: #{tpu_custom_call.1} parent=5 // pred_check_branch
      %127 = sbr.rel (%p125) target = $region24
    $region23: #{tpu_custom_call.1} parent=5 // pred_region
      // Predicated region
      $region25: #{tpu_custom_call.1} parent=23 // pred_check
        %p128 = pneg %p29
      $region26: #{tpu_custom_call.1} parent=23 // pred_check_branch
        %130 = sbr.rel (%p128) target = $region28
      $region27: #{tpu_custom_call.1} parent=23 // pred_region
        %p131 = scmp.lt.s32.totalorder %s9, 1
        %s132 = scalar_select %p131, %s9, 1
        %s133 = smul.addr %s132, 8
        %s134 = smul.addr %s133, 8
        %s135 = scalar_lea.vmem %s0, %s134
      $region28: #{tpu_custom_call.1} parent=23 // pred_fallthru
        _
    $region24: #{tpu_custom_call.1} parent=5 // pred_fallthru
      _
    %p136 = scmp.le.s32.totalorder 1, %s9
    %p137 = scmp.lt.s32.totalorder %s9, 3
    %p138 = pnand %p136, %p137
    %p139 = pneg %p138
    // Predicated region
    $region29: #{tpu_custom_call.1} parent=5 // pred_check
      _
    $region30: #{tpu_custom_call.1} parent=5 // pred_check_branch
      %141 = sbr.rel (%p138) target = $region32
    $region31: #{tpu_custom_call.1} parent=5 // pred_region
      %s142 = ssub.s32 %s9, 1
      %p143 = scmp.lt.s32.totalorder %s14, 1
      %s144 = scalar_select %p143, %s14, 1
      %s145 = smul.addr %s144, 8
      %s146 = smul.addr %s145, 8
      %s147 = scalar_lea.vmem %s0, %s146
      %p148 = pneg %p35
      %p149 = pneg %p32
      %p150 = pneg %p56
      %p151 = pneg %p53
      %p152 = pneg %p77
      %p153 = pneg %p74
      %p154 = pneg %p103
      %p155 = pneg %p100
      %p156 = scmp.lt.s32.totalorder %s14, 1
      %s157 = scalar_select %p156, %s14, 1
      %s158 = smul.addr %s157, 8
      %s159 = smul.addr %s158, 8
      %s160 = scalar_lea.vmem %s3, %s159
      %p161 = scmp.lt.s32.totalorder %s14, 1
      %s162 = scalar_select %p161, %s14, 1
      %s163 = smul.addr %s162, 8
      %s164 = smul.addr %s163, 8
      %s165 = scalar_lea.vmem %s0, %s164
      %p166 = scmp.lt.s32.totalorder %s14, 1
      %s167 = scalar_select %p166, %s14, 1
      %s168 = smul.addr %s167, 8
      %s169 = smul.addr %s168, 8
      %s170 = scalar_lea.vmem %s3, %s169
      %v171 = vld [vmem:[%s165] sm:$0xff]
      %v172 = vld [vmem:[%s165 + $0x8] sm:$0xff]
      %v173 = vld [vmem:[%s165 + $0x10] sm:$0xff]
      %v174 = vld [vmem:[%s165 + $0x18] sm:$0xff]
      %v175 = vld [vmem:[%s165 + $0x20] sm:$0xff]
      %v176 = vld [vmem:[%s165 + $0x28] sm:$0xff]
      %v177 = vld [vmem:[%s165 + $0x30] sm:$0xff]
      %v178 = vld [vmem:[%s165 + $0x38] sm:$0xff]
      %vm179 = vcmask 261120
      %v180 = vsel %vm179, %v171, 0.0
      %v181 = vsel %vm179, %v172, 0.0
      %v182 = vadd.f32 %v180, %v181
      %v183 = vsel %vm179, %v173, 0.0
      %v184 = vadd.f32 %v182, %v183
      %v185 = vsel %vm179, %v174, 0.0
      %v186 = vadd.f32 %v184, %v185
      %v187 = vsel %vm179, %v175, 0.0
      %v188 = vadd.f32 %v186, %v187
      %v189 = vsel %vm179, %v176, 0.0
      %v190 = vadd.f32 %v188, %v189
      %v191 = vsel %vm179, %v177, 0.0
      %v192 = vadd.f32 %v190, %v191
      %v193 = vsel %vm179, %v178, 0.0
      %v194 = vadd.f32 %v192, %v193
      %v195 = vrot.slane %v194, 4
      %v196 = vadd.f32 %v194, %v195
      %v197 = vrot.slane %v196, 2
      %v198 = vadd.f32 %v196, %v197
      %v199 = vrot.slane %v198, 1
      %v200 = vadd.f32 %v198, %v199
      %v201 = vmul.f32 %v200, 0.015625
      %v202 = vld [vmem:[%s1] sm:$0xff]
      %v203 = vld [vmem:[%s1 + $0x8] sm:$0xff]
      %v204 = vld [vmem:[%s1 + $0x10] sm:$0xff]
      %v205 = vld [vmem:[%s1 + $0x18] sm:$0xff]
      %v207 = vsel %vm179, %v201, 0
      %209 = vmatprep.subr.mxu0 0.0
      %210 = vmatpush1.msra.mxu0 0.0
      %211 = vmatprep.subr.mxu0 0.0
      %212 = vmatpush1.msra.mxu0 0.0
      %213 = vmatprep.subr.mxu0 0.0
      %214 = vmatpush1.msra.mxu0 0.0
      %215 = vmatprep.subr.mxu0 0.0
      %216 = vmatpush1.msra.mxu0 0.0
      %217 = vmatprep.subr.mxu0 0.0
      %218 = vmatpush1.msra.mxu0 0.0
      %219 = vmatprep.subr.mxu0 0.0
      %220 = vmatpush1.msra.mxu0 0.0
      %221 = vmatprep.subr.mxu0 0.0
      %222 = vmatpush1.msra.mxu0 0.0
      %223 = vmatprep.subr.mxu0 0.0
      %224 = vmatpush1.msra.mxu0 0.0
      %225 = vmatprep.subr.mxu0 0.0
      %226 = vmatpush1.msra.mxu0 0.0
      %227 = vmatprep.subr.mxu0 0.0
      %228 = vmatpush1.msra.mxu0 0.0
      %229 = vmatprep.subr.mxu0 0.0
      %230 = vmatpush1.msra.mxu0 0.0
      %231 = vmatprep.subr.mxu0 0.0
      %232 = vmatpush1.msra.mxu0 0.0
      %233 = vmatprep.subr.mxu0 0.0
      %234 = vmatpush1.msra.mxu0 %v205
      %235 = vmatprep.subr.mxu0 0.0
      %236 = vmatpush1.msra.mxu0 %v204
      %237 = vmatprep.subr.mxu0 0.0
      %238 = vmatpush1.msra.mxu0 %v203
      %239 = vmatprep.subr.mxu0 0.0
      %240 = vmatpush1.msra.mxu0 %v202
      %241 = vmatprep.subr.mxu0 0.0
      %242 = vmatpush2.msra.mxu0 0.0
      %243 = vmatprep.subr.mxu0 0.0
      %244 = vmatpush2.msra.mxu0 0.0
      %245 = vmatprep.subr.mxu0 0.0
      %246 = vmatpush2.msra.mxu0 0.0
      %247 = vmatprep.subr.mxu0 0.0
      %248 = vmatpush2.msra.mxu0 0.0
      %249 = vmatprep.subr.mxu0 0.0
      %250 = vmatpush2.msra.mxu0 0.0
      %251 = vmatprep.subr.mxu0 0.0
      %252 = vmatpush2.msra.mxu0 0.0
      %253 = vmatprep.subr.mxu0 0.0
      %254 = vmatpush2.msra.mxu0 0.0
      %255 = vmatprep.subr.mxu0 0.0
      %256 = vmatpush2.msra.mxu0 0.0
      %257 = vmatprep.subr.mxu0 0.0
      %258 = vmatpush2.msra.mxu0 0.0
      %259 = vmatprep.subr.mxu0 0.0
      %260 = vmatpush2.msra.mxu0 0.0
      %261 = vmatprep.subr.mxu0 0.0
      %262 = vmatpush2.msra.mxu0 0.0
      %263 = vmatprep.subr.mxu0 0.0
      %264 = vmatpush2.msra.mxu0 0.0
      %265 = vmatprep.subr.mxu0 0.0
      %266 = vmatpush2.msra.mxu0 0.0
      %267 = vmatprep.subr.mxu0 0.0
      %268 = vmatpush2.msra.mxu0 0.0
      %269 = vmatprep.subr.mxu0 0.0
      %270 = vmatpush2.msra.mxu0 0.0
      %271 = vmatprep.subr.mxu0 0.0
      %272 = vmatpush2.msra.mxu0 0.0
      %273 = vmatprep.mubr.f32.mxu0 0.0
      %274 = vmatmul.mubr.f32.gmra.mxu0 %v207
      %v275 = vpop.f32.mrf.mxu0
      %v276 = vadd.f32 0.0, %v275
      %v277 = vpop.f32.mrf.mxu0
      %278 = vdwg.mxu0
      %v279 = vmax.f32 %v276, 0.0
      %v280 = vld [vmem:[%s2] sm:$0x3]
      %vm281 = vcmask 15360
      %v283 = vsel %vm281, %v279, 0
      %vm285 = vcmask 1041408
      %v287 = vsel %vm285, %v280, 0
      %289 = vmatprep.subr.mxu0 0.0
      %290 = vmatpush1.msra.mxu0 0.0
      %291 = vmatprep.subr.mxu0 0.0
      %292 = vmatpush1.msra.mxu0 0.0
      %293 = vmatprep.subr.mxu0 0.0
      %294 = vmatpush1.msra.mxu0 0.0
      %295 = vmatprep.subr.mxu0 0.0
      %296 = vmatpush1.msra.mxu0 0.0
      %297 = vmatprep.subr.mxu0 0.0
      %298 = vmatpush1.msra.mxu0 0.0
      %299 = vmatprep.subr.mxu0 0.0
      %300 = vmatpush1.msra.mxu0 0.0
      %301 = vmatprep.subr.mxu0 0.0
      %302 = vmatpush1.msra.mxu0 0.0
      %303 = vmatprep.subr.mxu0 0.0
      %304 = vmatpush1.msra.mxu0 0.0
      %305 = vmatprep.subr.mxu0 0.0
      %306 = vmatpush1.msra.mxu0 0.0
      %307 = vmatprep.subr.mxu0 0.0
      %308 = vmatpush1.msra.mxu0 0.0
      %309 = vmatprep.subr.mxu0 0.0
      %310 = vmatpush1.msra.mxu0 0.0
      %311 = vmatprep.subr.mxu0 0.0
      %312 = vmatpush1.msra.mxu0 0.0
      %313 = vmatprep.subr.mxu0 0.0
      %314 = vmatpush1.msra.mxu0 0.0
      %315 = vmatprep.subr.mxu0 0.0
      %316 = vmatpush1.msra.mxu0 0.0
      %317 = vmatprep.subr.mxu0 0.0
      %318 = vmatpush1.msra.mxu0 0.0
      %319 = vmatprep.subr.mxu0 0.0
      %320 = vmatpush1.msra.mxu0 %v287
      %321 = vmatprep.subr.mxu0 0.0
      %322 = vmatpush2.msra.mxu0 0.0
      %323 = vmatprep.subr.mxu0 0.0
      %324 = vmatpush2.msra.mxu0 0.0
      %325 = vmatprep.subr.mxu0 0.0
      %326 = vmatpush2.msra.mxu0 0.0
      %327 = vmatprep.subr.mxu0 0.0
      %328 = vmatpush2.msra.mxu0 0.0
      %329 = vmatprep.subr.mxu0 0.0
      %330 = vmatpush2.msra.mxu0 0.0
      %331 = vmatprep.subr.mxu0 0.0
      %332 = vmatpush2.msra.mxu0 0.0
      %333 = vmatprep.subr.mxu0 0.0
      %334 = vmatpush2.msra.mxu0 0.0
      %335 = vmatprep.subr.mxu0 0.0
      %336 = vmatpush2.msra.mxu0 0.0
      %337 = vmatprep.subr.mxu0 0.0
      %338 = vmatpush2.msra.mxu0 0.0
      %339 = vmatprep.subr.mxu0 0.0
      %340 = vmatpush2.msra.mxu0 0.0
      %341 = vmatprep.subr.mxu0 0.0
      %342 = vmatpush2.msra.mxu0 0.0
      %343 = vmatprep.subr.mxu0 0.0
      %344 = vmatpush2.msra.mxu0 0.0
      %345 = vmatprep.subr.mxu0 0.0
      %346 = vmatpush2.msra.mxu0 0.0
      %347 = vmatprep.subr.mxu0 0.0
      %348 = vmatpush2.msra.mxu0 0.0
      %349 = vmatprep.subr.mxu0 0.0
      %350 = vmatpush2.msra.mxu0 0.0
      %351 = vmatprep.subr.mxu0 0.0
      %352 = vmatpush2.msra.mxu0 0.0
      %353 = vmatprep.mubr.f32.mxu0 0.0
      %354 = vmatmul.mubr.f32.gmra.mxu0 %v283
      %v355 = vpop.f32.mrf.mxu0
      %v356 = vadd.f32 0.0, %v355
      %v357 = vpop.f32.mrf.mxu0
      %358 = vdwg.mxu0
      %v359 = vxor.u32 %v356, 2147483648
      %v360 = vmul.f32 %v359, 1.442695
      %v361 = vpow.pop %v360
      %v362 = vadd.f32 %v361, 1.0
      %v363 = vrcp.pop %v362
      %v364 = vmul.f32 1.0, %v363
      %v365 = vlaneseq
      %v366 = vshrl.u32 %v365, 7
      %v367 = vsub.s32 0, %v366
      %v368 = vrot.slane %v364, %v367
      %v369 = vmul.f32 %v171, %v368
      %v370 = vmul.f32 %v172, %v368
      %v371 = vmul.f32 %v173, %v368
      %v372 = vmul.f32 %v174, %v368
      %v373 = vmul.f32 %v175, %v368
      %v374 = vmul.f32 %v176, %v368
      %v375 = vmul.f32 %v177, %v368
      %v376 = vmul.f32 %v178, %v368
      %377 = vst.msk [vmem:[%s170] sm:$0xff] %vm179, %v369
      %378 = vst.msk [vmem:[%s170 + $0x8] sm:$0xff] %vm179, %v370
      %379 = vst.msk [vmem:[%s170 + $0x10] sm:$0xff] %vm179, %v371
      %380 = vst.msk [vmem:[%s170 + $0x18] sm:$0xff] %vm179, %v372
      %381 = vst.msk [vmem:[%s170 + $0x20] sm:$0xff] %vm179, %v373
      %382 = vst.msk [vmem:[%s170 + $0x28] sm:$0xff] %vm179, %v374
      %383 = vst.msk [vmem:[%s170 + $0x30] sm:$0xff] %vm179, %v375
      %384 = vst.msk [vmem:[%s170 + $0x38] sm:$0xff] %vm179, %v376
      %p385 = scmp.lt.s32.totalorder %s14, 1
      %s386 = scalar_select %p385, %s14, 1
      %s387 = smul.addr %s386, 8
      %s388 = smul.addr %s387, 8
      %s389 = scalar_lea.vmem %s3, %s388
      // Predicated region
      $region33: #{tpu_custom_call.1} parent=31 // pred_check
        %p390 = pneg %p100
      $region34: #{tpu_custom_call.1} parent=31 // pred_check_branch
        %392 = sbr.rel (%p390) target = $region36
      $region35: #{tpu_custom_call.1} parent=31 // pred_region
        _
      $region36: #{tpu_custom_call.1} parent=31 // pred_fallthru
        _
    $region32: #{tpu_custom_call.1} parent=5 // pred_fallthru
      _
    %p393 = scmp.le.s32.totalorder 2, %s9
    // Predicated region
    $region37: #{tpu_custom_call.1} parent=5 // pred_check
      %p394 = pneg %p393
    $region38: #{tpu_custom_call.1} parent=5 // pred_check_branch
      %396 = sbr.rel (%p394) target = $region40
    $region39: #{tpu_custom_call.1} parent=5 // pred_region
      %s397 = ssub.s32 %s9, 2
      // Predicated region
      $region41: #{tpu_custom_call.1} parent=39 // pred_check
        %p398 = pneg %p106
      $region42: #{tpu_custom_call.1} parent=39 // pred_check_branch
        %400 = sbr.rel (%p398) target = $region44
      $region43: #{tpu_custom_call.1} parent=39 // pred_region
        %p401 = scmp.lt.s32.totalorder %s15, 1
        %s402 = scalar_select %p401, %s15, 1
        %s403 = smul.addr %s402, 8
        %s404 = smul.addr %s403, 8
        %s405 = scalar_lea.vmem %s3, %s404
      $region44: #{tpu_custom_call.1} parent=39 // pred_fallthru
        _
    $region40: #{tpu_custom_call.1} parent=5 // pred_fallthru
      _
  $region6: #{tpu_custom_call.1} parent=0 // loop_footer
    %s13 = sadd.s32 1, %s9
  $region7: #{tpu_custom_call.1} parent=0 // loop_footer_branch
    %8 = sbr.rel target = $region3
  $region8: #{tpu_custom_call.1} parent=0 // loop_exit
    _

</llo_original>
